<compile_context>
chip_gen: v6e
topology: v6e:2x2x1
jax: 0.10.0
libtpu: 0.0.40
codegen_flags: <defaults>
</compile_context>

<pallas_src>
import functools

import jax
import jax.numpy as jnp
from jax.experimental import pallas as pl
from jax.experimental.pallas import tpu as pltpu


def _make_kernel(k, k_blk):
    def kernel(x_ref, y_ref, b_ref, o_ref):
        # x_ref: (Rb, G)   -- G consecutive time values per 128-lane output row
        # y_ref: (G, 128)  -- interleave matrix (weights folded in), resident
        # b_ref: (1, 128)  -- per-lane bias pattern, resident
        # o_ref: (Rb, 128) -- flat row-major (N, K_blk) output slab
        lin = jnp.dot(x_ref[...], y_ref[...],
                      preferred_element_type=jnp.float32) + b_ref[...]
        lane_j = jax.lax.broadcasted_iota(jnp.int32, (1, 128), 1) % k_blk
        is_linear = lane_j == (k - 1)          # the w0/b0 feature lane(s)
        o_ref[...] = jnp.where(is_linear, lin, jnp.sin(lin)).astype(o_ref.dtype)

    return kernel


@functools.partial(jax.jit, static_argnames=("block_rows",))
def sine_activation(tau, w, b, w0, b0, *, block_rows=4096):
    """Pallas TPU implementation of SineActivation.forward.

    tau: (N, 1) f32; w/b: (1, K-1); w0/b0: (1, 1)  ->  (N, K) f32.
    """
    n = tau.shape[0]
    k = w.shape[1] + 1
    dtype = tau.dtype
    if k > 128:
        # TODO(synk): K > 128 would need >1 output row per time step.
        raise NotImplementedError("out_features > 128 not supported")

    # Pad K up to a power of two so it divides the 128-lane row evenly.
    k_blk = 1 << (k - 1).bit_length() if k > 1 else 1
    g = 128 // k_blk                      # time steps per 128-lane output row

    # Number of 128-lane output rows, rounded up to a sublane multiple of 8.
    rows = pl.cdiv(n, g)
    rows = ((rows + 7) // 8) * 8
    n_pad = rows * g

    tau_flat = tau.reshape(n)
    if n_pad != n:
        tau_flat = jnp.pad(tau_flat, (0, n_pad - n))
    x = tau_flat.reshape(rows, g)

    # Lane patterns: feature j = l % k_blk; padded features (j >= K) are inert 0s.
    w_full = jnp.concatenate(
        [w.reshape(-1), w0.reshape(-1), jnp.zeros((k_blk - k,), dtype)]).astype(dtype)
    b_full = jnp.concatenate(
        [b.reshape(-1), b0.reshape(-1), jnp.zeros((k_blk - k,), dtype)]).astype(dtype)
    lane = jnp.arange(128)
    w_pat = w_full[lane % k_blk]                               # (128,)
    b_pat = b_full[lane % k_blk]                               # (128,)
    c_of_l = lane // k_blk                                     # (128,)
    y = (w_pat[None, :] *
         (c_of_l[None, :] == jnp.arange(g)[:, None])).astype(dtype)   # (g, 128)
    b_row = b_pat[None, :]                                     # (1, 128)

    rb = min(block_rows, rows)
    grid = (pl.cdiv(rows, rb),)

    out_flat = pl.pallas_call(
        _make_kernel(k, k_blk),
        out_shape=jax.ShapeDtypeStruct((rows, 128), dtype),
        grid_spec=pltpu.PrefetchScalarGridSpec(
            num_scalar_prefetch=0,
            grid=grid,
            in_specs=[
                pl.BlockSpec((rb, g), lambda i: (i, 0)),    # tau rows (pipelined)
                pl.BlockSpec((g, 128), lambda i: (0, 0)),   # Y (fetched once, resident)
                pl.BlockSpec((1, 128), lambda i: (0, 0)),   # bias row (resident)
            ],
            out_specs=pl.BlockSpec((rb, 128), lambda i: (i, 0)),
        ),
        compiler_params=pltpu.CompilerParams(
            dimension_semantics=("parallel",),
        ),
        cost_estimate=pl.CostEstimate(
            flops=2 * rows * 128 * g,
            transcendentals=rows * 128,
            bytes_accessed=4 * (rows * g + g * 128 + 128 + rows * 128),
        ),
    )(x, y, b_row)

    # (rows, 128) flat row-major == (n_pad, k_blk): reshape is layout-free.
    return out_flat.reshape(n_pad, k_blk)[:n, :k]


def sine_activation_ref(tau, w, b, w0, b0):
    v1 = jnp.sin(tau @ w + b)
    v2 = tau @ w0 + b0
    return jnp.concatenate([v1, v2], axis=1)


if __name__ == "__main__":
    out_features = 8   # K

    key = jax.random.PRNGKey(0)
    k_tau, k_w, k_b, k_w0, k_b0 = jax.random.split(key, 5)

    w = jax.random.normal(k_w, (1, out_features - 1), dtype=jnp.float32)
    b = jax.random.normal(k_b, (1, out_features - 1), dtype=jnp.float32)
    w0 = jax.random.normal(k_w0, (1, 1), dtype=jnp.float32)
    b0 = jax.random.normal(k_b0, (1, 1), dtype=jnp.float32)

    # Small shape consistent with the module (single-block path).
    n = 16
    tau = jax.random.normal(k_tau, (n, 1), dtype=jnp.float32)
    out = jax.block_until_ready(sine_activation(tau, w, b, w0, b0))
    ref = sine_activation_ref(tau, w, b, w0, b0)
    assert out.shape == (n, out_features), out.shape
    assert jnp.allclose(out, ref, atol=1e-5, rtol=1e-5), "mismatch vs reference (n=16)"

    # Larger, non-aligned N exercising multi-block + ragged-last-block path.
    n2 = 1000
    tau2 = jax.random.normal(k_tau, (n2, 1), dtype=jnp.float32)
    out2 = jax.block_until_ready(sine_activation(tau2, w, b, w0, b0, block_rows=24))
    ref2 = sine_activation_ref(tau2, w, b, w0, b0)
    assert out2.shape == (n2, out_features), out2.shape
    assert jnp.allclose(out2, ref2, atol=1e-5, rtol=1e-5), "mismatch vs reference (n=1000)"

    print("KERNEL_OK")
</pallas_src>

<mosaic_0001>
module attributes {stable_mosaic.version = 11 : i64} {
  func.func @kernel(%arg0: i32, %arg1: memref<8x16xf32, #tpu.memory_space<vmem>>, %arg2: memref<16x128xf32, #tpu.memory_space<vmem>>, %arg3: memref<1x128xf32, #tpu.memory_space<vmem>>, %arg4: memref<8x128xf32, #tpu.memory_space<vmem>>) attributes {dimension_semantics = [#tpu.dimension_semantics<parallel>], iteration_bounds = array<i64: 1>, scalar_prefetch = 0 : i64, scratch_operands = 0 : i64, tpu.core_type = #tpu.core_type<tc>, window_params = [{transform_indices = @transform_0, window_bounds = array<i64: 8, 16>}, {pipeline_mode = #tpu.pipeline_mode<synchronous>, transform_indices = @transform_1, window_bounds = array<i64: 16, 128>}, {pipeline_mode = #tpu.pipeline_mode<synchronous>, transform_indices = @transform_2, window_bounds = array<i64: 1, 128>}, {transform_indices = @transform_3, window_bounds = array<i64: 8, 128>}]} {
    %c0 = arith.constant 0 : index
    %c0_0 = arith.constant 0 : index
    %0 = vector.load %arg1[%c0, %c0_0] : memref<8x16xf32, #tpu.memory_space<vmem>>, vector<8x16xf32>
    %c0_1 = arith.constant 0 : index
    %c0_2 = arith.constant 0 : index
    %1 = vector.load %arg2[%c0_1, %c0_2] : memref<16x128xf32, #tpu.memory_space<vmem>>, vector<16x128xf32>
    %cst = arith.constant dense<0.000000e+00> : vector<8x128xf32>
    %2 = tpu.matmul %0, %1, %cst {dimension_numbers = #tpu.dot_dimension_numbers<[1], [0], [0], [1], [0, 0, 1, 1], [], []>} : vector<8x16xf32>, vector<16x128xf32>, vector<8x128xf32> -> vector<8x128xf32>
    %c0_3 = arith.constant 0 : index
    %c0_4 = arith.constant 0 : index
    %3 = vector.load %arg3[%c0_3, %c0_4] : memref<1x128xf32, #tpu.memory_space<vmem>>, vector<1x128xf32>
    %4 = vector.broadcast %3 : vector<1x128xf32> to vector<8x128xf32>
    %5 = arith.addf %2, %4 : vector<8x128xf32>
    %6 = tpu.iota {dimensions = array<i32: 1>} : vector<1x128xi32>
    %c8_i32 = arith.constant 8 : i32
    %c0_i32 = arith.constant 0 : i32
    %7 = arith.cmpi eq, %c8_i32, %c0_i32 : i32
    %c1_i32 = arith.constant 1 : i32
    %8 = arith.select %7, %c1_i32, %c8_i32 : i32
    %9 = vector.broadcast %8 : i32 to vector<1x128xi32>
    %10 = arith.remsi %6, %9 : vector<1x128xi32>
    %c0_i32_5 = arith.constant 0 : i32
    %11 = vector.broadcast %c0_i32_5 : i32 to vector<1x128xi32>
    %12 = arith.cmpi ne, %10, %11 : vector<1x128xi32>
    %c0_i32_6 = arith.constant 0 : i32
    %13 = vector.broadcast %c0_i32_6 : i32 to vector<1x128xi32>
    %14 = arith.cmpi slt, %10, %13 : vector<1x128xi32>
    %c0_i32_7 = arith.constant 0 : i32
    %15 = arith.cmpi slt, %8, %c0_i32_7 : i32
    %16 = vector.broadcast %15 : i1 to vector<1x128xi1>
    %17 = vector.broadcast %16 : vector<1x128xi1> to vector<1x128xi1>
    %18 = arith.xori %14, %17 : vector<1x128xi1>
    %19 = arith.andi %18, %12 : vector<1x128xi1>
    %20 = vector.broadcast %8 : i32 to vector<1x128xi32>
    %21 = arith.addi %10, %20 : vector<1x128xi32>
    %22 = arith.select %19, %21, %10 : vector<1x128xi1>, vector<1x128xi32>
    %c7_i32 = arith.constant 7 : i32
    %23 = vector.broadcast %c7_i32 : i32 to vector<1x128xi32>
    %24 = arith.cmpi eq, %22, %23 : vector<1x128xi32>
    %25 = math.sin %5 : vector<8x128xf32>
    %26 = vector.shape_cast %24 : vector<1x128xi1> to vector<1x128xi1>
    %27 = vector.broadcast %26 : vector<1x128xi1> to vector<8x128xi1>
    %28 = arith.select %27, %5, %25 : vector<8x128xi1>, vector<8x128xf32>
    %c0_8 = arith.constant 0 : index
    %c0_9 = arith.constant 0 : index
    %29 = vector.load %arg4[%c0_8, %c0_9] : memref<8x128xf32, #tpu.memory_space<vmem>>, vector<8x128xf32>
    tpu.vector_store %arg4[%c0_8, %c0_9], %28 {strides = array<i32>} : memref<8x128xf32, #tpu.memory_space<vmem>>, vector<8x128xf32>,
    return
  }
  func.func @transform_0(%arg0: i32) -> (i32, i32) {
    %c0_i32 = arith.constant 0 : i32
    %c0_i32_0 = arith.constant 0 : i32
    return %arg0, %c0_i32 : i32, i32
  }
  func.func @transform_1(%arg0: i32) -> (i32, i32) {
    %c0_i32 = arith.constant 0 : i32
    %c0_i32_0 = arith.constant 0 : i32
    %c0_i32_1 = arith.constant 0 : i32
    return %c0_i32, %c0_i32_0 : i32, i32
  }
  func.func @transform_2(%arg0: i32) -> (i32, i32) {
    %c0_i32 = arith.constant 0 : i32
    %c0_i32_0 = arith.constant 0 : i32
    %c0_i32_1 = arith.constant 0 : i32
    return %c0_i32, %c0_i32_0 : i32, i32
  }
  func.func @transform_3(%arg0: i32) -> (i32, i32) {
    %c0_i32 = arith.constant 0 : i32
    %c0_i32_0 = arith.constant 0 : i32
    return %arg0, %c0_i32 : i32, i32
  }
}

</mosaic_0001>

<llo_original>
// kernel: sine_activation.1
$region0: #{sine_activation.1}
  #allocation0 [shape = 'u32[]', space=smem, size = 0x4, offset = 0x4, fixed_abs, tag = 'smem constant byte address 0x4 - core index']
  #allocation1 [shape = 'u32[144,128]{1,0:T(1,128)}', space=vmem, size = 0x12000, scoped, tag = 'internal scratch']
  %s0 = inlined_call_operand.vmem [shape: f32[8,16], index: 0, kind: input, shape index: {}]
  %s1 = inlined_call_operand.vmem [shape: f32[16,128], index: 1, kind: input, shape index: {}]
  %s2 = inlined_call_operand.vmem [shape: f32[1,128], index: 2, kind: input, shape index: {}]
  %s3 = inlined_call_operand.vmem [shape: f32[8,128], index: 3, kind: output, shape index: {}]
  %s4 = sld [smem:[#allocation0]]
  $region22: #{sine_activation.1} parent=0
    _
  %s6 = ssub.s32 1, %s4
  %s7 = scalar_select 0, %s6, %s4
  // Predicated region
  $region2: #{sine_activation.1} parent=0 // pred_check
    _
  $region3: #{sine_activation.1} parent=0 // pred_check_branch
    %9 = sbr.rel (0) target = $region5
  $region4: #{sine_activation.1} parent=0 // pred_region
    _
  $region5: #{sine_activation.1} parent=0 // pred_fallthru
    _
  // Predicated region
  $region6: #{sine_activation.1} parent=0 // pred_check
    _
  $region7: #{sine_activation.1} parent=0 // pred_check_branch
    %11 = sbr.rel (0) target = $region9
  $region8: #{sine_activation.1} parent=0 // pred_region
    _
  $region9: #{sine_activation.1} parent=0 // pred_fallthru
    _
  // Predicated region
  $region10: #{sine_activation.1} parent=0 // pred_check
    _
  $region11: #{sine_activation.1} parent=0 // pred_check_branch
    %13 = sbr.rel (0) target = $region13
  $region12: #{sine_activation.1} parent=0 // pred_region
    _
  $region13: #{sine_activation.1} parent=0 // pred_fallthru
    _
  %v14 = vld [vmem:[%s0] sm:$0xff]
  %v15 = vld [vmem:[%s1] sm:$0xff]
  %v16 = vld [vmem:[%s1 + $0x8] sm:$0xff]
  %v17 = vld [vmem:[%s2] sm:$0x1]
  %v19 = vlaneseq
  %v20 = vshrl.u32 %v19, 7
  %v21 = vsub.s32 0, %v20
  %v22 = vrot.slane %v17, %v21
  %vm24 = vcmask 130048
  %v26 = vsel %vm24, %v14, 0
  %28 = vmatprep.subr.mxu0 0.0
  %29 = vmatpush1.msra.mxu0 0.0
  %30 = vmatprep.subr.mxu0 0.0
  %31 = vmatpush1.msra.mxu0 0.0
  %32 = vmatprep.subr.mxu0 0.0
  %33 = vmatpush1.msra.mxu0 0.0
  %34 = vmatprep.subr.mxu0 0.0
  %35 = vmatpush1.msra.mxu0 0.0
  %36 = vmatprep.subr.mxu0 0.0
  %37 = vmatpush1.msra.mxu0 0.0
  %38 = vmatprep.subr.mxu0 0.0
  %39 = vmatpush1.msra.mxu0 0.0
  %40 = vmatprep.subr.mxu0 0.0
  %41 = vmatpush1.msra.mxu0 0.0
  %42 = vmatprep.subr.mxu0 0.0
  %43 = vmatpush1.msra.mxu0 0.0
  %44 = vmatprep.subr.mxu0 0.0
  %45 = vmatpush1.msra.mxu0 0.0
  %46 = vmatprep.subr.mxu0 0.0
  %47 = vmatpush1.msra.mxu0 0.0
  %48 = vmatprep.subr.mxu0 0.0
  %49 = vmatpush1.msra.mxu0 0.0
  %50 = vmatprep.subr.mxu0 0.0
  %51 = vmatpush1.msra.mxu0 0.0
  %52 = vmatprep.subr.mxu0 0.0
  %53 = vmatpush1.msra.mxu0 0.0
  %54 = vmatprep.subr.mxu0 0.0
  %55 = vmatpush1.msra.mxu0 0.0
  %56 = vmatprep.subr.mxu0 0.0
  %57 = vmatpush1.msra.mxu0 %v16
  %58 = vmatprep.subr.mxu0 0.0
  %59 = vmatpush1.msra.mxu0 %v15
  %60 = vmatprep.subr.mxu0 0.0
  %61 = vmatpush2.msra.mxu0 0.0
  %62 = vmatprep.subr.mxu0 0.0
  %63 = vmatpush2.msra.mxu0 0.0
  %64 = vmatprep.subr.mxu0 0.0
  %65 = vmatpush2.msra.mxu0 0.0
  %66 = vmatprep.subr.mxu0 0.0
  %67 = vmatpush2.msra.mxu0 0.0
  %68 = vmatprep.subr.mxu0 0.0
  %69 = vmatpush2.msra.mxu0 0.0
  %70 = vmatprep.subr.mxu0 0.0
  %71 = vmatpush2.msra.mxu0 0.0
  %72 = vmatprep.subr.mxu0 0.0
  %73 = vmatpush2.msra.mxu0 0.0
  %74 = vmatprep.subr.mxu0 0.0
  %75 = vmatpush2.msra.mxu0 0.0
  %76 = vmatprep.subr.mxu0 0.0
  %77 = vmatpush2.msra.mxu0 0.0
  %78 = vmatprep.subr.mxu0 0.0
  %79 = vmatpush2.msra.mxu0 0.0
  %80 = vmatprep.subr.mxu0 0.0
  %81 = vmatpush2.msra.mxu0 0.0
  %82 = vmatprep.subr.mxu0 0.0
  %83 = vmatpush2.msra.mxu0 0.0
  %84 = vmatprep.subr.mxu0 0.0
  %85 = vmatpush2.msra.mxu0 0.0
  %86 = vmatprep.subr.mxu0 0.0
  %87 = vmatpush2.msra.mxu0 0.0
  %88 = vmatprep.subr.mxu0 0.0
  %89 = vmatpush2.msra.mxu0 0.0
  %90 = vmatprep.subr.mxu0 0.0
  %91 = vmatpush2.msra.mxu0 0.0
  %92 = vmatprep.mubr.f32.mxu0 0.0
  %93 = vmatmul.mubr.f32.gmra.mxu0 %v26
  %v94 = vpop.f32.mrf.mxu0
  %v95 = vadd.f32 %v22, %v94
  %v96 = vpop.f32.mrf.mxu0
  %97 = vdwg.mxu0
  %v98 = vlaneseq
  %v99 = vand.u32 %v98, 127
  %vm100 = vcmp.lt.s32.totalorder %v99, 0
  %v101 = vsub.s32 0, %v99
  %v102 = vsel %vm100, %v101, %v99
  %v103 = vshrl.u32 %v102, 3
  %v104 = vand.u32 %v102, 7
  %v105 = vsub.s32 0, %v104
  %v106 = vsel %vm100, %v105, %v104
  %vm107 = vcmp.ne.s32.totalorder %v106, 0
  %vm108 = vcmp.lt.s32.totalorder %v106, 0
  %vm109 = vmand %vm108, %vm107
  %v110 = vadd.s32 %v106, 8
  %v111 = vsel %vm109, %v110, %v106
  %vm112 = vcmp.eq.s32.totalorder %v111, 7
  %v113 = vand.u32 2147483647, %v95
  %vm114 = vcmp.le.f32.partialorder %v113, 0.7853982
  %vm115 = vcmp.lt.s32.totalorder %v95, 0
  %v116 = vand.u32 %v95, 2139095040
  %v117 = vshrl.u32 %v116, 23
  %v118 = vsub.s32 %v117, 127
  %v119 = vand.u32 2147483647, %v95
  %v120 = vand.u32 %v119, 8388607
  %v121 = vor.u32 %v120, 8388608
  %v122 = vsub.s32 0, %v121
  %v123 = vadd.s32 %v118, 1
  %vm124 = vcmp.gt.s32.totalorder %v123, 0
  %v125 = vsel %vm124, %v123, 0
  %v126 = vshrl.u32 %v125, 5
  %v127 = vand.u32 %v125, 31
  %v128 = vsub.s32 32, %v127
  %v129 = vshrl.u32 683565275, %v128
  %v130 = vshll.u32 683565275, %v127
  %v131 = vshrl.u32 2475754826, %v128
  %v132 = vor.u32 %v130, %v131
  %v133 = vshll.u32 2475754826, %v127
  %v134 = vshrl.u32 2131351028, %v128
  %v135 = vor.u32 %v133, %v134
  %v136 = vshll.u32 2131351028, %v127
  %v137 = vshrl.u32 2102212464, %v128
  %v138 = vor.u32 %v136, %v137
  %v139 = vshll.u32 2102212464, %v127
  %v140 = vshrl.u32 920167782, %v128
  %v141 = vor.u32 %v139, %v140
  %v142 = vshll.u32 920167782, %v127
  %v143 = vshrl.u32 1326507024, %v128
  %v144 = vor.u32 %v142, %v143
  %vm145 = vcmp.lt.s32.totalorder %v126, 1
  %vm146 = vcmp.lt.s32.totalorder %v126, 2
  %vm147 = vcmp.lt.s32.totalorder %v126, 3
  %vm148 = vcmp.lt.s32.totalorder %v126, 4
  %v149 = vsel %vm145, %v129, %v132
  %v150 = vsel %vm148, %v138, 2102212464
  %v151 = vsel %vm147, %v135, %v150
  %v152 = vsel %vm146, %v149, %v151
  %v153 = vsel %vm145, %v132, %v135
  %v154 = vsel %vm148, %v141, 920167782
  %v155 = vsel %vm147, %v138, %v154
  %v156 = vsel %vm146, %v153, %v155
  %v157 = vsel %vm145, %v135, %v138
  %v158 = vsel %vm148, %v144, 1326507024
  %v159 = vsel %vm147, %v141, %v158
  %v160 = vsel %vm146, %v157, %v159
  %v161 = vshll.u32 %v121, 8
  %v162 = vmul.u32.u64.compose %v161, %v160
  %v163 = vextract.low.u32 %v162
  %v164 = vextract.high.u32 %v162
  %v165 = vmul.u32.u64.compose %v161, %v156
  %v166 = vextract.low.u32 %v165
  %v167 = vextract.high.u32 %v165
  %v168 = vmul.u32 %v161, %v152
  %v169 = vadd.s32 %v164, %v166
  %vm170 = vc.u32 %v164, %v166
  %v171 = vadd.s32 %v167, 1
  %v172 = vsel %vm170, %v171, %v167
  %v173 = vadd.s32 %v168, %v172
  %v174 = vadd.s32 %v173, 536870912
  %v175 = vshrl.u32 %v174, 30
  %v176 = vshll.u32 %v175, 30
  %v177 = vsub.s32 %v173, %v176
  %vm178 = vcmp.lt.s32.totalorder %v177, 0
  %v179 = vsub.s32 0, %v177
  %v180 = vsel %vm178, %v179, %v177
  %v181 = vclz %v180
  %v182 = vsub.s32 %v181, 2
  %vm183 = vcmp.gt.s32.totalorder 0, %v182
  %v184 = vsel %vm183, 0, %v182
  %v185 = vsub.s32 32, %v184
  %v186 = vshll.u32 %v177, %v184
  %v187 = vshrl.u32 %v169, %v185
  %v188 = vor.u32 %v186, %v187
  %v189 = vsub.s32 4294967266, %v184
  %v190 = vadd.s32 %v189, 127
  %v191 = vshll.u32 %v190, 23
  %v192 = vor.u32 4788187, %v191
  %v193 = vand.u32 2147483647, %v192
  %v195 = vcvt.s32.f32 %v188
  %v196 = vmul.f32 %v195, %v193
  %v197 = vxor.u32 %v196, 2147483648
  %v198 = vsel %vm115, %v197, %v196
  %v199 = vsub.s32 4, %v175
  %v200 = vsel %vm115, %v199, %v175
  %v201 = vsel %vm114, %v95, %v198
  %v202 = vsel %vm114, 0, %v200
  %v203 = vcosq.f32.pop %v201
  %v204 = vsinq.f32.pop %v201
  %vm205 = vweird.f32 %v95
  %v206 = vadd.s32 %v202, 3
  %v207 = vand.u32 %v206, 3
  %vm208 = vcmp.lt.s32.totalorder %v207, 2
  %vm209 = vcmp.eq.s32.totalorder %v207, 0
  %v210 = vxor.u32 %v204, 2147483648
  %v211 = vsel %vm209, %v203, %v210
  %vm212 = vcmp.eq.s32.totalorder %v207, 2
  %v213 = vxor.u32 %v203, 2147483648
  %v214 = vsel %vm212, %v213, %v204
  %v215 = vsel %vm208, %v211, %v214
  %v216 = vsel %vm205, nan, %v215
  %v217 = vsel %vm112, 1, 0
  %vm218 = vcmp.eq.s32.totalorder %v217, 1
  %v219 = vsel %vm218, %v95, %v216
  %220 = vst [vmem:[%s3] sm:$0xff] %v219
  // Predicated region
  $region14: #{sine_activation.1} parent=0 // pred_check
    _
  $region15: #{sine_activation.1} parent=0 // pred_check_branch
    %222 = sbr.rel (0) target = $region17
  $region16: #{sine_activation.1} parent=0 // pred_region
    _
  $region17: #{sine_activation.1} parent=0 // pred_fallthru
    _
  // Predicated region
  $region18: #{sine_activation.1} parent=0 // pred_check
    _
  $region19: #{sine_activation.1} parent=0 // pred_check_branch
    %224 = sbr.rel (0) target = $region21
  $region20: #{sine_activation.1} parent=0 // pred_region
    _
  $region21: #{sine_activation.1} parent=0 // pred_fallthru
    _

</llo_original>
